<compile_context>
chip_gen: v7x
topology: tpu7x:2x2x1
jax: 0.10.0
libtpu: 0.0.40
codegen_flags: <defaults>
</compile_context>

<pallas_src>
import jax
import jax.numpy as jnp
from jax.experimental import pallas as pl
from jax.experimental.pallas import tpu as pltpu

DIM_Y = 1          # matches `dim_y = 1` in the reference module
_LANE = 128        # TPU lane width
_TB_MAX = 1024     # batch tile: 2 buffers x 1024 x 128 x 4 B = 1 MiB of VMEM


def _observation_kernel(x_ref, o_ref):
    # x_ref: (TB, DT)     -- first lane tile of the state vector, this batch tile
    # o_ref: (dim_y, TB)  -- lane-dense output block (batch mapped to lanes)
    dim_y = o_ref.shape[0]
    o_ref[...] = jnp.transpose(x_ref[:, :dim_y], (1, 0))


def observation_model(x: jax.Array, dim_y: int = DIM_Y) -> jax.Array:
    """Pallas equivalent of `observation_model(dim_y).forward(x)` for 2-D x."""
    assert x.ndim == 2, "expected x of shape [batch, dim_x]"
    B, D = x.shape

    # Only the first lane tile of the state axis is ever read.
    dt = D if D <= _LANE else _LANE
    assert dim_y <= dt, "dim_y must live inside the first 128-lane tile"

    # Batch tiling: full extent when small, otherwise 1024-row tiles
    # (1024 is a multiple of both 8 sublanes and 128 lanes, so partial
    # trailing blocks are handled by Pallas masking).
    tb = B if B <= _TB_MAX else _TB_MAX
    grid = (pl.cdiv(B, tb),)

    out_t = pl.pallas_call(
        _observation_kernel,
        out_shape=jax.ShapeDtypeStruct((dim_y, B), x.dtype),
        grid=grid,
        in_specs=[pl.BlockSpec((tb, dt), lambda i: (i, 0))],
        out_specs=pl.BlockSpec((dim_y, tb), lambda i: (0, i)),
        compiler_params=pltpu.CompilerParams(
            dimension_semantics=("parallel",)),
    )(x)

    # Back to the module's [batch, dim_y] convention (layout plumbing only;
    # XLA fuses this transpose into the consumer).
    return out_t.T


def _reference(x: jax.Array, dim_y: int = DIM_Y) -> jax.Array:
    return x[:, :dim_y]


if __name__ == "__main__":
    key = jax.random.PRNGKey(0)

    # Small shape consistent with an SSM latent state: batch=8, dim_x=32.
    x_small = jax.random.normal(key, (8, 32), dtype=jnp.float32)
    y_small = jax.block_until_ready(observation_model(x_small))
    assert y_small.shape == (8, DIM_Y), y_small.shape
    assert jnp.array_equal(y_small, _reference(x_small)), "mismatch (small)"

    # Modest shape with dim_x > 128: exercises the "first lane tile only" DMA.
    x_wide = jax.random.normal(jax.random.PRNGKey(0), (256, 160), dtype=jnp.float32)
    y_wide = jax.block_until_ready(observation_model(x_wide))
    assert y_wide.shape == (256, DIM_Y), y_wide.shape
    assert jnp.array_equal(y_wide, _reference(x_wide)), "mismatch (wide)"

    print("KERNEL_OK")
</pallas_src>

<mosaic_0001>
module attributes {stable_mosaic.version = 11 : i64} {
  func.func @_observation_kernel(%arg0: i32, %arg1: memref<8x32xf32, #tpu.memory_space<vmem>>, %arg2: memref<1x8xf32, #tpu.memory_space<vmem>>) attributes {dimension_semantics = [#tpu.dimension_semantics<parallel>], iteration_bounds = array<i64: 1>, scalar_prefetch = 0 : i64, scratch_operands = 0 : i64, tpu.core_type = #tpu.core_type<tc>, window_params = [{transform_indices = @transform_0, window_bounds = array<i64: 8, 32>}, {transform_indices = @transform_1, window_bounds = array<i64: 1, 8>}]} {
    %c0 = arith.constant 0 : index
    %c0_0 = arith.constant 0 : index
    %0 = vector.load %arg1[%c0, %c0_0] : memref<8x32xf32, #tpu.memory_space<vmem>>, vector<8x1xf32>
    %1 = tpu.transpose %0, [1, 0] : vector<8x1xf32> -> vector<1x8xf32>
    %c0_1 = arith.constant 0 : index
    %c0_2 = arith.constant 0 : index
    %2 = vector.load %arg2[%c0_1, %c0_2] : memref<1x8xf32, #tpu.memory_space<vmem>>, vector<1x8xf32>
    tpu.vector_store %arg2[%c0_1, %c0_2], %1 {strides = array<i32>} : memref<1x8xf32, #tpu.memory_space<vmem>>, vector<1x8xf32>,
    return
  }
  func.func @transform_0(%arg0: i32) -> (i32, i32) {
    %c0_i32 = arith.constant 0 : i32
    %c0_i32_0 = arith.constant 0 : i32
    return %arg0, %c0_i32 : i32, i32
  }
  func.func @transform_1(%arg0: i32) -> (i32, i32) {
    %c0_i32 = arith.constant 0 : i32
    %c0_i32_0 = arith.constant 0 : i32
    return %c0_i32, %arg0 : i32, i32
  }
}

</mosaic_0001>

<llo_original>
// kernel: tpu_custom_call.1
$region0: #{tpu_custom_call.1}
  #allocation0 [shape = 'u32[]', space=smem, size = 0x4, offset = 0x4, fixed_abs, tag = 'smem constant byte address 0x4 - core index']
  #allocation1 [shape = 'u32[144,128]{1,0:T(1,128)}', space=vmem, size = 0x12000, scoped, tag = 'internal scratch']
  %s0 = inlined_call_operand.hbm [shape: f32[8,32], index: 0, kind: input, shape index: {}]
  %s1 = inlined_call_operand.hbm [shape: f32[1,8], index: 1, kind: output, shape index: {}]
  %s2 = sld [smem:[#allocation0]]
  $region18: #{tpu_custom_call.1} parent=0
    _
  %s4 = ssub.s32 1, %s2
  %s5 = scalar_select 0, %s4, %s2
  $region1: #{tpu_custom_call.1} parent=0
    #allocation2 [shape = 'u8[4096]{0}', space=vmem, size = 0x1000, scoped, tag = 'input window, operand 0, single buffered']
    #allocation3 [shape = 's32[1]{0}', space=sflag, size = 0x4, scoped, tag = 'scoped memory for tpu_custom_call.1']
    #allocation4 [shape = 's32[1]{0}', space=sflag, size = 0x4, scoped, tag = 'scoped memory for tpu_custom_call.1']
    #allocation5 [shape = 'u8[512]{0}', space=vmem, size = 0x400, scoped, tag = 'output window, operand 0, single buffered']
    %6 = vsyncpa [#allocation3], 0
    %7 = vsyncpa [#allocation4], 0
    // Predicated region
    $region2: #{tpu_custom_call.1} parent=1 // pred_check
      _
    $region3: #{tpu_custom_call.1} parent=1 // pred_check_branch
      %9 = sbr.rel (0) target = $region5
    $region4: #{tpu_custom_call.1} parent=1 // pred_region
      %s11 = ssub.s32 128, 128
      %12 = vsyncadd [#allocation3], %s11
      %s14 = sshll.u32 [#allocation2], 4
      %s15 = int_to_ptr.vmem [resolvable:$true] %s14
      %17 = dma.hbm_to_vmem [thread:$0]  %s0, 128, %s15, [#allocation3]
    $region5: #{tpu_custom_call.1} parent=1 // pred_fallthru
      _
    // Predicated region
    $region6: #{tpu_custom_call.1} parent=1 // pred_check
      _
    $region7: #{tpu_custom_call.1} parent=1 // pred_check_branch
      %19 = sbr.rel (0) target = $region9
    $region8: #{tpu_custom_call.1} parent=1 // pred_region
      %20 = dma.done [#allocation3], 128
    $region9: #{tpu_custom_call.1} parent=1 // pred_fallthru
      _
    %v21 = vld [vmem:[#allocation2] sm:$0xff]
    %22 = vxpose.xlu0.b32.start [1/16] %v21, 128
    %23 = vxpose.xlu0.b32.cont [2/16] 0.0, 128
    %24 = vxpose.xlu0.b32.cont [3/16] 0.0, 128
    %25 = vxpose.xlu0.b32.cont [4/16] 0.0, 128
    %26 = vxpose.xlu0.b32.cont [5/16] 0.0, 128
    %27 = vxpose.xlu0.b32.cont [6/16] 0.0, 128
    %28 = vxpose.xlu0.b32.cont [7/16] 0.0, 128
    %29 = vxpose.xlu0.b32.cont [8/16] 0.0, 128
    %30 = vxpose.xlu0.b32.cont [9/16] 0.0, 128
    %31 = vxpose.xlu0.b32.cont [10/16] 0.0, 128
    %32 = vxpose.xlu0.b32.cont [11/16] 0.0, 128
    %33 = vxpose.xlu0.b32.cont [12/16] 0.0, 128
    %34 = vxpose.xlu0.b32.cont [13/16] 0.0, 128
    %35 = vxpose.xlu0.b32.cont [14/16] 0.0, 128
    %36 = vxpose.xlu0.b32.cont [15/16] 0.0, 128
    %37 = vxpose.xlu0.b32.end [16/16] 0.0, 128
    %v38 = vpop.trf.xlu0
    %v39 = vpop.trf.xlu0
    %v40 = vpop.trf.xlu0
    %v41 = vpop.trf.xlu0
    %v42 = vpop.trf.xlu0
    %v43 = vpop.trf.xlu0
    %v44 = vpop.trf.xlu0
    %v45 = vpop.trf.xlu0
    %v46 = vpop.trf.xlu0
    %v47 = vpop.trf.xlu0
    %v48 = vpop.trf.xlu0
    %v49 = vpop.trf.xlu0
    %v50 = vpop.trf.xlu0
    %v51 = vpop.trf.xlu0
    %v52 = vpop.trf.xlu0
    %v53 = vpop.trf.xlu0
    %vm54 = vcmask 57344
    %55 = vst.msk [vmem:[#allocation5] sm:$0x1] %vm54, %v38
    // Predicated region
    $region10: #{tpu_custom_call.1} parent=1 // pred_check
      _
    $region11: #{tpu_custom_call.1} parent=1 // pred_check_branch
      %57 = sbr.rel (0) target = $region13
    $region12: #{tpu_custom_call.1} parent=1 // pred_region
      %s59 = ssub.s32 16, 16
      %60 = vsyncadd [#allocation4], %s59
      %s62 = sshll.u32 [#allocation5], 4
      %s63 = int_to_ptr.vmem [resolvable:$true] %s62
      %65 = dma.vmem_to_hbm [thread:$0]  %s63, 16, %s1, [#allocation4]
    $region13: #{tpu_custom_call.1} parent=1 // pred_fallthru
      _
    // Predicated region
    $region14: #{tpu_custom_call.1} parent=1 // pred_check
      _
    $region15: #{tpu_custom_call.1} parent=1 // pred_check_branch
      %67 = sbr.rel (0) target = $region17
    $region16: #{tpu_custom_call.1} parent=1 // pred_region
      %68 = dma.done [#allocation4], 16
    $region17: #{tpu_custom_call.1} parent=1 // pred_fallthru
      _
    %69 = vsyncpa [#allocation3], 1
    %70 = vsyncpa [#allocation4], 1

</llo_original>
